<compile_context>
chip_gen: v6e
topology: v6e:2x2x1
jax: 0.10.0
libtpu: 0.0.40
codegen_flags: <defaults>
</compile_context>

<pallas_src>
import jax
import jax.numpy as jnp
from jax.experimental import pallas as pl
from jax.experimental.pallas import tpu as pltpu

DATASET_CLASSES = 527
OUTPUT_CLASSES = 5


def _round_up(n, m):
    return ((n + m - 1) // m) * m


def _fc_sigmoid_kernel(x_ref, w_ref, b_ref, o_ref):
    # x_ref: (TB, 527) f32 (streamed from HBM), w_ref: (527, 5) bf16,
    # b_ref: (1, 5) f32, o_ref: (TB, 5) f32.
    # Cast x to bf16 on the VPU right before the dot (hidden under the DMA);
    # the MXU accumulates in f32 via preferred_element_type.
    x_bf = x_ref[...].astype(jnp.bfloat16)
    y = jnp.dot(x_bf, w_ref[...], preferred_element_type=jnp.float32)
    y = y + b_ref[...]  # broadcast (1, 5) over batch rows, f32
    # Exact sigmoid: exp on the EUP, true divide on the VPU -- both have
    # huge slack at this HBM-bound operating point.
    o_ref[...] = 1.0 / (1.0 + jnp.exp(-y))


def net_forward(x, w_t, b, *, tile_rows=2048):
    """x: (B, 527) f32, w_t: (527, 5) f32, b: (5,) f32 -> (B, 5) f32."""
    batch = x.shape[0]

    # Batch tile: multiple of 8 (f32 sublane constraint), capped by
    # tile_rows (VMEM budget) and by ~ceil(B/2) so v7x's second TensorCore
    # always gets a grid step when there is enough work.
    tb = min(
        _round_up(batch, 8),
        tile_rows,
        _round_up(pl.cdiv(batch, 2), 8),
    )
    tb = max(tb, 8)
    grid_rows = pl.cdiv(batch, tb)  # non-divisible grid: no wrapper padding

    # Tiny VMEM-resident operands; converting w to bf16 here is negligible.
    w_bf16 = w_t.astype(jnp.bfloat16)
    b2d = b.reshape(1, OUTPUT_CLASSES).astype(jnp.float32)

    cost = pl.CostEstimate(
        flops=2 * batch * DATASET_CLASSES * OUTPUT_CLASSES,
        bytes_accessed=(batch * DATASET_CLASSES * 4          # x read (f32)
                        + batch * OUTPUT_CLASSES * 4         # out write (f32)
                        + DATASET_CLASSES * OUTPUT_CLASSES * 2  # w (bf16)
                        + OUTPUT_CLASSES * 4),               # bias
        transcendentals=batch * OUTPUT_CLASSES,
    )

    out = pl.pallas_call(
        _fc_sigmoid_kernel,
        out_shape=jax.ShapeDtypeStruct((batch, OUTPUT_CLASSES), jnp.float32),
        grid=(grid_rows,),
        in_specs=[
            pl.BlockSpec((tb, DATASET_CLASSES), lambda i: (i, 0)),
            pl.BlockSpec((DATASET_CLASSES, OUTPUT_CLASSES), lambda i: (0, 0)),
            pl.BlockSpec((1, OUTPUT_CLASSES), lambda i: (0, 0)),
        ],
        out_specs=pl.BlockSpec((tb, OUTPUT_CLASSES), lambda i: (i, 0)),
        compiler_params=pltpu.CompilerParams(
            dimension_semantics=("parallel",),
            vmem_limit_bytes=32 * 1024 * 1024,
        ),
        cost_estimate=cost,
    )(x, w_bf16, b2d)

    return out


def init_params(key):
    """Deterministic xavier_normal_ weight + zero bias (matches nn.init)."""
    fan_in, fan_out = DATASET_CLASSES, OUTPUT_CLASSES
    std = (2.0 / (fan_in + fan_out)) ** 0.5
    # PyTorch weight shape is (out, in); we keep the transposed (in, out) copy.
    w = std * jax.random.normal(key, (fan_out, fan_in), dtype=jnp.float32)
    w_t = w.T  # (527, 5)
    b = jnp.zeros((fan_out,), dtype=jnp.float32)
    return w_t, b


if __name__ == "__main__":
    key = jax.random.PRNGKey(0)
    k_w, k_x = jax.random.split(key)

    w_t, b = init_params(k_w)

    # Small demo batch: with the >=2-grid-step cap this gives TB=152 and a
    # 2-step grid whose last tile is ragged (300 = 152 + 148), exercising the
    # non-divisible-grid path with no wrapper padding.
    batch = 300
    x = jax.random.normal(k_x, (batch, DATASET_CLASSES), dtype=jnp.float32)

    out = net_forward(x, w_t, b)
    out = jax.block_until_ready(out)

    # Pure-JAX reference on the same bf16-rounded operands (the kernel casts
    # x / w to bf16 for the MXU, accumulates in f32, exact sigmoid).
    x_bf = x.astype(jnp.bfloat16).astype(jnp.float32)
    w_bf = w_t.astype(jnp.bfloat16).astype(jnp.float32)
    ref = jax.nn.sigmoid(x_bf @ w_bf + b[None, :])

    assert out.shape == (batch, OUTPUT_CLASSES)
    assert bool(jnp.allclose(out, ref, atol=2e-3, rtol=2e-3))

    print("KERNEL_OK")
</pallas_src>

<mosaic_0001>
module attributes {stable_mosaic.version = 11 : i64} {
  func.func @_fc_sigmoid_kernel(%arg0: i32, %arg1: memref<152x527xf32, #tpu.memory_space<vmem>>, %arg2: memref<527x5xbf16, #tpu.memory_space<vmem>>, %arg3: memref<1x5xf32, #tpu.memory_space<vmem>>, %arg4: memref<152x5xf32, #tpu.memory_space<vmem>>) attributes {dimension_semantics = [#tpu.dimension_semantics<parallel>], iteration_bounds = array<i64: 2>, scalar_prefetch = 0 : i64, scratch_operands = 0 : i64, tpu.core_type = #tpu.core_type<tc>, window_params = [{transform_indices = @transform_0, window_bounds = array<i64: 152, 527>}, {pipeline_mode = #tpu.pipeline_mode<synchronous>, transform_indices = @transform_1, window_bounds = array<i64: 527, 5>}, {pipeline_mode = #tpu.pipeline_mode<synchronous>, transform_indices = @transform_2, window_bounds = array<i64: 1, 5>}, {transform_indices = @transform_3, window_bounds = array<i64: 152, 5>}]} {
    %c0 = arith.constant 0 : index
    %c0_0 = arith.constant 0 : index
    %0 = vector.load %arg1[%c0, %c0_0] : memref<152x527xf32, #tpu.memory_space<vmem>>, vector<152x527xf32>
    %1 = arith.truncf %0 : vector<152x527xf32> to vector<152x527xbf16>
    %c0_1 = arith.constant 0 : index
    %c0_2 = arith.constant 0 : index
    %2 = vector.load %arg2[%c0_1, %c0_2] : memref<527x5xbf16, #tpu.memory_space<vmem>>, vector<527x5xbf16>
    %cst = arith.constant dense<0.000000e+00> : vector<152x5xf32>
    %3 = tpu.matmul %1, %2, %cst {dimension_numbers = #tpu.dot_dimension_numbers<[1], [0], [0], [1], [0, 0, 1, 1], [], []>} : vector<152x527xbf16>, vector<527x5xbf16>, vector<152x5xf32> -> vector<152x5xf32>
    %c0_3 = arith.constant 0 : index
    %c0_4 = arith.constant 0 : index
    %4 = vector.load %arg3[%c0_3, %c0_4] : memref<1x5xf32, #tpu.memory_space<vmem>>, vector<1x5xf32>
    %5 = vector.broadcast %4 : vector<1x5xf32> to vector<152x5xf32>
    %6 = arith.addf %3, %5 : vector<152x5xf32>
    %cst_5 = arith.constant 0.000000e+00 : f32
    %7 = vector.broadcast %cst_5 : f32 to vector<152x5xf32>
    %8 = arith.subf %7, %6 : vector<152x5xf32>
    %9 = math.exp %8 : vector<152x5xf32>
    %cst_6 = arith.constant 1.000000e+00 : f32
    %10 = vector.broadcast %cst_6 : f32 to vector<152x5xf32>
    %11 = arith.addf %10, %9 : vector<152x5xf32>
    %cst_7 = arith.constant 1.000000e+00 : f32
    %12 = vector.broadcast %cst_7 : f32 to vector<152x5xf32>
    %13 = arith.divf %12, %11 : vector<152x5xf32>
    %c0_8 = arith.constant 0 : index
    %c0_9 = arith.constant 0 : index
    %14 = vector.load %arg4[%c0_8, %c0_9] : memref<152x5xf32, #tpu.memory_space<vmem>>, vector<152x5xf32>
    tpu.vector_store %arg4[%c0_8, %c0_9], %13 {strides = array<i32>} : memref<152x5xf32, #tpu.memory_space<vmem>>, vector<152x5xf32>,
    return
  }
  func.func @transform_0(%arg0: i32) -> (i32, i32) {
    %c0_i32 = arith.constant 0 : i32
    %c0_i32_0 = arith.constant 0 : i32
    return %arg0, %c0_i32 : i32, i32
  }
  func.func @transform_1(%arg0: i32) -> (i32, i32) {
    %c0_i32 = arith.constant 0 : i32
    %c0_i32_0 = arith.constant 0 : i32
    %c0_i32_1 = arith.constant 0 : i32
    return %c0_i32, %c0_i32_0 : i32, i32
  }
  func.func @transform_2(%arg0: i32) -> (i32, i32) {
    %c0_i32 = arith.constant 0 : i32
    %c0_i32_0 = arith.constant 0 : i32
    %c0_i32_1 = arith.constant 0 : i32
    return %c0_i32, %c0_i32_0 : i32, i32
  }
  func.func @transform_3(%arg0: i32) -> (i32, i32) {
    %c0_i32 = arith.constant 0 : i32
    %c0_i32_0 = arith.constant 0 : i32
    return %arg0, %c0_i32 : i32, i32
  }
}

</mosaic_0001>

<llo_original>
// kernel: tpu_custom_call.1
$region0: #{tpu_custom_call.1}
  #allocation0 [shape = 'u32[]', space=smem, size = 0x4, offset = 0x4, fixed_abs, tag = 'smem constant byte address 0x4 - core index']
  #allocation1 [shape = 'u32[144,128]{1,0:T(1,128)}', space=vmem, size = 0x12000, scoped, tag = 'internal scratch']
  %s0 = inlined_call_operand.hbm [shape: f32[300,527], index: 0, kind: input, shape index: {}]
  %s1 = inlined_call_operand.vmem [shape: bf16[527,5], index: 1, kind: input, shape index: {}]
  %s2 = inlined_call_operand.vmem [shape: f32[1,5], index: 2, kind: input, shape index: {}]
  %s3 = inlined_call_operand.vmem [shape: f32[300,5], index: 3, kind: output, shape index: {}]
  %s4 = sld [smem:[#allocation0]]
  $region49: #{tpu_custom_call.1} parent=0
    _
  %s6 = ssub.s32 1, %s4
  %s7 = scalar_select 0, %s6, %s4
  $region1: #{tpu_custom_call.1} parent=0
    #allocation2 [shape = 'u8[778240]{0}', space=vmem, size = 0xbe000, scoped, tag = 'input window, operand 0']
    #allocation3 [shape = 's32[2]{0}', space=sflag, size = 0x8, scoped, tag = 'scoped memory for tpu_custom_call.1']
    %8 = vsyncpa [#allocation3], 0
    %s9 = scalar_lea.sflag [#allocation3], 1
    %10 = vsyncpa %s9, 0
    loop: start=0, step=1, limit=4
    $region2: #{tpu_custom_call.1} parent=1 // loop_pre_header
      _
    $region3: #{tpu_custom_call.1} parent=1 // loop_header
      %s12 = sphi 0, %s16
      %p13 = scmp.ge.s32.totalorder %s12, 4
      %s22 = sphi 0, %s24
      %s25 = sphi 0, %s22
      %s26 = sphi 0, %s25
      %s42 = sphi 0, %s26
      %s46 = sphi 0, %s46
      %s48 = sphi 0, %s46
      %s49 = sphi 0, %s48
      %s63 = sphi 0, %s49
      %s67 = sphi 0, %s67
      %s69 = sphi 0, %s67
      %s70 = sphi 0, %s69
      %s84 = sphi 0, %s70
      %s90 = sphi 0, %s92
      %s93 = sphi 0, %s90
      %s94 = sphi 0, %s93
      %s110 = sphi 0, %s94
    $region4: #{tpu_custom_call.1} parent=1 // loop_header_branch
      %15 = sbr.rel (%p13) target = $region8
    $region5: #{tpu_custom_call.1} parent=1 // loop_body
      %s17 = ssub.s32 %s12, 1
      %s18 = ssub.s32 %s12, 2
      %s19 = sadd.s32 %s12, 1
      %s20 = ssub.s32 %s12, %s19
      %p21 = scmp.eq.s32.totalorder %s20, 0
      %s23 = sadd.s32 %s22, 1
      %s24 = scalar_select %p21, %s22, %s23
      %p27 = pneg %p21
      %p28 = scmp.eq.s32.totalorder %s12, 1
      %p29 = por %p27, %p28
      %p30 = scmp.ne.s32.totalorder %s22, %s25
      %p31 = scmp.eq.s32.totalorder %s12, 0
      %p32 = por %p30, %p31
      %p33 = scmp.ne.s32.totalorder %s22, %s25
      %p34 = scmp.eq.s32.totalorder %s17, 1
      %p35 = por %p33, %p34
      %p36 = scmp.ne.s32.totalorder %s25, %s26
      %p37 = scmp.eq.s32.totalorder %s17, 0
      %p38 = por %p36, %p37
      %p39 = scmp.ne.s32.totalorder %s25, %s26
      %p40 = scmp.eq.s32.totalorder %s18, 1
      %p41 = por %p39, %p40
      %p43 = scmp.ne.s32.totalorder %s26, %s42
      %p44 = scmp.eq.s32.totalorder %s18, 0
      %p45 = por %p43, %p44
      %s47 = sadd.s32 %s46, 1
      %p50 = scmp.eq.s32.totalorder %s12, 1
      %p51 = scmp.ne.s32.totalorder %s46, %s48
      %p52 = scmp.eq.s32.totalorder %s12, 0
      %p53 = por %p51, %p52
      %p54 = scmp.ne.s32.totalorder %s46, %s48
      %p55 = scmp.eq.s32.totalorder %s17, 1
      %p56 = por %p54, %p55
      %p57 = scmp.ne.s32.totalorder %s48, %s49
      %p58 = scmp.eq.s32.totalorder %s17, 0
      %p59 = por %p57, %p58
      %p60 = scmp.ne.s32.totalorder %s48, %s49
      %p61 = scmp.eq.s32.totalorder %s18, 1
      %p62 = por %p60, %p61
      %p64 = scmp.ne.s32.totalorder %s49, %s63
      %p65 = scmp.eq.s32.totalorder %s18, 0
      %p66 = por %p64, %p65
      %s68 = sadd.s32 %s67, 1
      %p71 = scmp.eq.s32.totalorder %s12, 1
      %p72 = scmp.ne.s32.totalorder %s67, %s69
      %p73 = scmp.eq.s32.totalorder %s12, 0
      %p74 = por %p72, %p73
      %p75 = scmp.ne.s32.totalorder %s67, %s69
      %p76 = scmp.eq.s32.totalorder %s17, 1
      %p77 = por %p75, %p76
      %p78 = scmp.ne.s32.totalorder %s69, %s70
      %p79 = scmp.eq.s32.totalorder %s17, 0
      %p80 = por %p78, %p79
      %p81 = scmp.ne.s32.totalorder %s69, %s70
      %p82 = scmp.eq.s32.totalorder %s18, 1
      %p83 = por %p81, %p82
      %p85 = scmp.ne.s32.totalorder %s70, %s84
      %p86 = scmp.eq.s32.totalorder %s18, 0
      %p87 = por %p85, %p86
      %s88 = ssub.s32 %s12, %s19
      %p89 = scmp.eq.s32.totalorder %s88, 0
      %s91 = sadd.s32 %s90, 1
      %s92 = scalar_select %p89, %s90, %s91
      %p95 = pneg %p89
      %p96 = scmp.eq.s32.totalorder %s12, 1
      %p97 = por %p95, %p96
      %p98 = scmp.ne.s32.totalorder %s90, %s93
      %p99 = scmp.eq.s32.totalorder %s12, 0
      %p100 = por %p98, %p99
      %p101 = scmp.ne.s32.totalorder %s90, %s93
      %p102 = scmp.eq.s32.totalorder %s17, 1
      %p103 = por %p101, %p102
      %p104 = scmp.ne.s32.totalorder %s93, %s94
      %p105 = scmp.eq.s32.totalorder %s17, 0
      %p106 = por %p104, %p105
      %p107 = scmp.ne.s32.totalorder %s93, %s94
      %p108 = scmp.eq.s32.totalorder %s18, 1
      %p109 = por %p107, %p108
      %p111 = scmp.ne.s32.totalorder %s94, %s110
      %p112 = scmp.eq.s32.totalorder %s18, 0
      %p113 = por %p111, %p112
      %p114 = scmp.le.s32.totalorder 1, %s12
      %p115 = scmp.lt.s32.totalorder %s12, 3
      %p116 = pnand %p114, %p115
      %p117 = pneg %p116
      // Predicated region
      $region9: #{tpu_custom_call.1} parent=5 // pred_check
        _
      $region10: #{tpu_custom_call.1} parent=5 // pred_check_branch
        %119 = sbr.rel (%p116) target = $region12
      $region11: #{tpu_custom_call.1} parent=5 // pred_region
        %s120 = ssub.s32 %s12, 1
        // Predicated region
        $region13: #{tpu_custom_call.1} parent=11 // pred_check
          %p121 = pneg %p59
        $region14: #{tpu_custom_call.1} parent=11 // pred_check_branch
          %123 = sbr.rel (%p121) target = $region16
        $region15: #{tpu_custom_call.1} parent=11 // pred_region
          _
        $region16: #{tpu_custom_call.1} parent=11 // pred_fallthru
          _
        // Predicated region
        $region17: #{tpu_custom_call.1} parent=11 // pred_check
          %p124 = pneg %p80
        $region18: #{tpu_custom_call.1} parent=11 // pred_check_branch
          %126 = sbr.rel (%p124) target = $region20
        $region19: #{tpu_custom_call.1} parent=11 // pred_region
          _
        $region20: #{tpu_custom_call.1} parent=11 // pred_fallthru
          _
      $region12: #{tpu_custom_call.1} parent=5 // pred_fallthru
        _
      %p127 = scmp.lt.s32.totalorder %s12, 2
      // Predicated region
      $region21: #{tpu_custom_call.1} parent=5 // pred_check
        %p128 = pneg %p127
      $region22: #{tpu_custom_call.1} parent=5 // pred_check_branch
        %130 = sbr.rel (%p128) target = $region24
      $region23: #{tpu_custom_call.1} parent=5 // pred_region
        // Predicated region
        $region25: #{tpu_custom_call.1} parent=23 // pred_check
          %p131 = pneg %p32
        $region26: #{tpu_custom_call.1} parent=23 // pred_check_branch
          %133 = sbr.rel (%p131) target = $region28
        $region27: #{tpu_custom_call.1} parent=23 // pred_region
          %s134 = sand.u32 %s22, 1
          %s135 = scalar_lea.sflag [#allocation3], %s134
          %s136 = sand.u32 %s22, 1
          %s137 = smul.addr %s136, 760
          %s138 = scalar_lea.vmem [#allocation2], %s137
          %s139 = smul.u32 19, %s12
          %s141 = ssub.s32 12160, 12160
          %142 = vsyncadd %s135, %s141
          %s143 = smul.addr %s139, 5
          %s144 = smul.addr %s143, 128
          %s145 = scalar_lea.hbm %s0, %s144
          %s146 = sshll.u32 %s138, 4
          %s147 = int_to_ptr.vmem [resolvable:$true] %s146
          %152 = dma.hbm_to_vmem [thread:$0]  %s145, 12160, %s147, %s135, 640, 640, 40
        $region28: #{tpu_custom_call.1} parent=23 // pred_fallthru
          _
      $region24: #{tpu_custom_call.1} parent=5 // pred_fallthru
        _
      %p153 = scmp.le.s32.totalorder 1, %s12
      %p154 = scmp.lt.s32.totalorder %s12, 3
      %p155 = pnand %p153, %p154
      %p156 = pneg %p155
      // Predicated region
      $region29: #{tpu_custom_call.1} parent=5 // pred_check
        _
      $region30: #{tpu_custom_call.1} parent=5 // pred_check_branch
        %158 = sbr.rel (%p155) target = $region32
      $region31: #{tpu_custom_call.1} parent=5 // pred_region
        %s159 = ssub.s32 %s12, 1
        %s160 = sand.u32 %s25, 1
        %s161 = scalar_lea.sflag [#allocation3], %s160
        %s162 = sand.u32 %s25, 1
        %s163 = smul.addr %s162, 760
        %s164 = scalar_lea.vmem [#allocation2], %s163
        // Predicated region
        $region33: #{tpu_custom_call.1} parent=31 // pred_check
          %p165 = pneg %p38
        $region34: #{tpu_custom_call.1} parent=31 // pred_check_branch
          %167 = sbr.rel (%p165) target = $region36
        $region35: #{tpu_custom_call.1} parent=31 // pred_region
          %168 = dma.done %s161, 12160
        $region36: #{tpu_custom_call.1} parent=31 // pred_fallthru
          _
        %s169 = sand.u32 %s25, 1
        %s170 = scalar_lea.sflag [#allocation3], %s169
        %s171 = sand.u32 %s25, 1
        %s172 = smul.addr %s171, 760
        %s173 = scalar_lea.vmem [#allocation2], %s172
        %p174 = pneg %p38
        %p175 = pneg %p35
        %p176 = pneg %p59
        %p177 = pneg %p56
        %p178 = pneg %p80
        %p179 = pneg %p77
        %p180 = pneg %p106
        %p181 = pneg %p103
        %s182 = smul.u32 19, %s17
        %p183 = scmp.lt.s32.totalorder %s182, 37
        %s184 = scalar_select %p183, %s182, 37
        %s185 = smul.addr %s184, 8
        %s186 = scalar_lea.vmem %s3, %s185
        %s187 = smul.u32 19, %s17
        %s188 = smul.u32 19, %s17
        %p189 = scmp.lt.s32.totalorder %s188, 37
        %s190 = scalar_select %p189, %s188, 37
        %s191 = smul.addr %s190, 8
        %s192 = scalar_lea.vmem %s3, %s191
        %s193 = smul.u32 19, %s17
        %v195 = vld [vmem:[%s164] sm:$0xff]
        %v196 = vld [vmem:[%s164 + $0x8] sm:$0xff]
        %v197 = vld [vmem:[%s164 + $0x10] sm:$0xff]
        %v198 = vld [vmem:[%s164 + $0x18] sm:$0xff]
        %v199 = vld [vmem:[%s164 + $0x20] sm:$0xff]
        %v200 = vld [vmem:[%s164 + $0x28] sm:$0xff]
        %v201 = vld [vmem:[%s164 + $0x30] sm:$0xff]
        %v202 = vld [vmem:[%s164 + $0x38] sm:$0xff]
        %v203 = vld [vmem:[%s164 + $0x40] sm:$0xff]
        %v204 = vld [vmem:[%s164 + $0x48] sm:$0xff]
        %v205 = vld [vmem:[%s164 + $0x50] sm:$0xff]
        %v206 = vld [vmem:[%s164 + $0x58] sm:$0xff]
        %v207 = vld [vmem:[%s164 + $0x60] sm:$0xff]
        %v208 = vld [vmem:[%s164 + $0x68] sm:$0xff]
        %v209 = vld [vmem:[%s164 + $0x70] sm:$0xff]
        %v210 = vld [vmem:[%s164 + $0x78] sm:$0xff]
        %v211 = vld [vmem:[%s164 + $0x80] sm:$0xff]
        %v212 = vld [vmem:[%s164 + $0x88] sm:$0xff]
        %v213 = vld [vmem:[%s164 + $0x90] sm:$0xff]
        %v214 = vld [vmem:[%s164 + $0x98] sm:$0xff]
        %v215 = vld [vmem:[%s164 + $0xa0] sm:$0xff]
        %v216 = vld [vmem:[%s164 + $0xa8] sm:$0xff]
        %v217 = vld [vmem:[%s164 + $0xb0] sm:$0xff]
        %v218 = vld [vmem:[%s164 + $0xb8] sm:$0xff]
        %v219 = vld [vmem:[%s164 + $0xc0] sm:$0xff]
        %v220 = vld [vmem:[%s164 + $0xc8] sm:$0xff]
        %v221 = vld [vmem:[%s164 + $0xd0] sm:$0xff]
        %v222 = vld [vmem:[%s164 + $0xd8] sm:$0xff]
        %v223 = vld [vmem:[%s164 + $0xe0] sm:$0xff]
        %v224 = vld [vmem:[%s164 + $0xe8] sm:$0xff]
        %v225 = vld [vmem:[%s164 + $0xf0] sm:$0xff]
        %v226 = vld [vmem:[%s164 + $0xf8] sm:$0xff]
        %v227 = vld [vmem:[%s164 + $0x100] sm:$0xff]
        %v228 = vld [vmem:[%s164 + $0x108] sm:$0xff]
        %v229 = vld [vmem:[%s164 + $0x110] sm:$0xff]
        %v230 = vld [vmem:[%s164 + $0x118] sm:$0xff]
        %v231 = vld [vmem:[%s164 + $0x120] sm:$0xff]
        %v232 = vld [vmem:[%s164 + $0x128] sm:$0xff]
        %v233 = vld [vmem:[%s164 + $0x130] sm:$0xff]
        %v234 = vld [vmem:[%s164 + $0x138] sm:$0xff]
        %v235 = vld [vmem:[%s164 + $0x140] sm:$0xff]
        %v236 = vld [vmem:[%s164 + $0x148] sm:$0xff]
        %v237 = vld [vmem:[%s164 + $0x150] sm:$0xff]
        %v238 = vld [vmem:[%s164 + $0x158] sm:$0xff]
        %v239 = vld [vmem:[%s164 + $0x160] sm:$0xff]
        %v240 = vld [vmem:[%s164 + $0x168] sm:$0xff]
        %v241 = vld [vmem:[%s164 + $0x170] sm:$0xff]
        %v242 = vld [vmem:[%s164 + $0x178] sm:$0xff]
        %v243 = vld [vmem:[%s164 + $0x180] sm:$0xff]
        %v244 = vld [vmem:[%s164 + $0x188] sm:$0xff]
        %v245 = vld [vmem:[%s164 + $0x190] sm:$0xff]
        %v246 = vld [vmem:[%s164 + $0x198] sm:$0xff]
        %v247 = vld [vmem:[%s164 + $0x1a0] sm:$0xff]
        %v248 = vld [vmem:[%s164 + $0x1a8] sm:$0xff]
        %v249 = vld [vmem:[%s164 + $0x1b0] sm:$0xff]
        %v250 = vld [vmem:[%s164 + $0x1b8] sm:$0xff]
        %v251 = vld [vmem:[%s164 + $0x1c0] sm:$0xff]
        %v252 = vld [vmem:[%s164 + $0x1c8] sm:$0xff]
        %v253 = vld [vmem:[%s164 + $0x1d0] sm:$0xff]
        %v254 = vld [vmem:[%s164 + $0x1d8] sm:$0xff]
        %v255 = vld [vmem:[%s164 + $0x1e0] sm:$0xff]
        %v256 = vld [vmem:[%s164 + $0x1e8] sm:$0xff]
        %v257 = vld [vmem:[%s164 + $0x1f0] sm:$0xff]
        %v258 = vld [vmem:[%s164 + $0x1f8] sm:$0xff]
        %v259 = vld [vmem:[%s164 + $0x200] sm:$0xff]
        %v260 = vld [vmem:[%s164 + $0x208] sm:$0xff]
        %v261 = vld [vmem:[%s164 + $0x210] sm:$0xff]
        %v262 = vld [vmem:[%s164 + $0x218] sm:$0xff]
        %v263 = vld [vmem:[%s164 + $0x220] sm:$0xff]
        %v264 = vld [vmem:[%s164 + $0x228] sm:$0xff]
        %v265 = vld [vmem:[%s164 + $0x230] sm:$0xff]
        %v266 = vld [vmem:[%s164 + $0x238] sm:$0xff]
        %v267 = vld [vmem:[%s164 + $0x240] sm:$0xff]
        %v268 = vld [vmem:[%s164 + $0x248] sm:$0xff]
        %v269 = vld [vmem:[%s164 + $0x250] sm:$0xff]
        %v270 = vld [vmem:[%s164 + $0x258] sm:$0xff]
        %v271 = vld [vmem:[%s164 + $0x260] sm:$0xff]
        %v272 = vld [vmem:[%s164 + $0x268] sm:$0xff]
        %v273 = vld [vmem:[%s164 + $0x270] sm:$0xff]
        %v274 = vld [vmem:[%s164 + $0x278] sm:$0xff]
        %v275 = vld [vmem:[%s164 + $0x280] sm:$0xff]
        %v276 = vld [vmem:[%s164 + $0x288] sm:$0xff]
        %v277 = vld [vmem:[%s164 + $0x290] sm:$0xff]
        %v278 = vld [vmem:[%s164 + $0x298] sm:$0xff]
        %v279 = vld [vmem:[%s164 + $0x2a0] sm:$0xff]
        %v280 = vld [vmem:[%s164 + $0x2a8] sm:$0xff]
        %v281 = vld [vmem:[%s164 + $0x2b0] sm:$0xff]
        %v282 = vld [vmem:[%s164 + $0x2b8] sm:$0xff]
        %v283 = vld [vmem:[%s164 + $0x2c0] sm:$0xff]
        %v284 = vld [vmem:[%s164 + $0x2c8] sm:$0xff]
        %v285 = vld [vmem:[%s164 + $0x2d0] sm:$0xff]
        %v286 = vld [vmem:[%s164 + $0x2d8] sm:$0xff]
        %v287 = vld [vmem:[%s164 + $0x2e0] sm:$0xff]
        %v288 = vld [vmem:[%s164 + $0x2e8] sm:$0xff]
        %v289 = vld [vmem:[%s164 + $0x2f0] sm:$0xff]
        %v290 = vpack.c.bf16 %v200, %v195
        %v291 = vpack.c.bf16 %v201, %v196
        %v292 = vpack.c.bf16 %v202, %v197
        %v293 = vpack.c.bf16 %v203, %v198
        %v294 = vpack.c.bf16 %v204, %v199
        %v295 = vpack.c.bf16 %v210, %v205
        %v296 = vpack.c.bf16 %v211, %v206
        %v297 = vpack.c.bf16 %v212, %v207
        %v298 = vpack.c.bf16 %v213, %v208
        %v299 = vpack.c.bf16 %v214, %v209
        %v300 = vpack.c.bf16 %v220, %v215
        %v301 = vpack.c.bf16 %v221, %v216
        %v302 = vpack.c.bf16 %v222, %v217
        %v303 = vpack.c.bf16 %v223, %v218
        %v304 = vpack.c.bf16 %v224, %v219
        %v305 = vpack.c.bf16 %v230, %v225
        %v306 = vpack.c.bf16 %v231, %v226
        %v307 = vpack.c.bf16 %v232, %v227
        %v308 = vpack.c.bf16 %v233, %v228
        %v309 = vpack.c.bf16 %v234, %v229
        %v310 = vpack.c.bf16 %v240, %v235
        %v311 = vpack.c.bf16 %v241, %v236
        %v312 = vpack.c.bf16 %v242, %v237
        %v313 = vpack.c.bf16 %v243, %v238
        %v314 = vpack.c.bf16 %v244, %v239
        %v315 = vpack.c.bf16 %v250, %v245
        %v316 = vpack.c.bf16 %v251, %v246
        %v317 = vpack.c.bf16 %v252, %v247
        %v318 = vpack.c.bf16 %v253, %v248
        %v319 = vpack.c.bf16 %v254, %v249
        %v320 = vpack.c.bf16 %v260, %v255
        %v321 = vpack.c.bf16 %v261, %v256
        %v322 = vpack.c.bf16 %v262, %v257
        %v323 = vpack.c.bf16 %v263, %v258
        %v324 = vpack.c.bf16 %v264, %v259
        %v325 = vpack.c.bf16 %v270, %v265
        %v326 = vpack.c.bf16 %v271, %v266
        %v327 = vpack.c.bf16 %v272, %v267
        %v328 = vpack.c.bf16 %v273, %v268
        %v329 = vpack.c.bf16 %v274, %v269
        %v330 = vpack.c.bf16 %v280, %v275
        %v331 = vpack.c.bf16 %v281, %v276
        %v332 = vpack.c.bf16 %v282, %v277
        %v333 = vpack.c.bf16 %v283, %v278
        %v334 = vpack.c.bf16 %v284, %v279
        %v335 = vpack.c.bf16 %v285, %v285
        %v336 = vpack.c.bf16 %v286, %v286
        %v337 = vpack.c.bf16 %v287, %v287
        %v338 = vpack.c.bf16 %v288, %v288
        %v339 = vpack.c.bf16 %v289, %v289
        %v340 = vld [vmem:[%s1] sm:$0xf]
        %v341 = vld [vmem:[%s1 + $0x4] sm:$0xf]
        %v342 = vld [vmem:[%s1 + $0x8] sm:$0xf]
        %v343 = vld [vmem:[%s1 + $0xc] sm:$0xf]
        %v344 = vld [vmem:[%s1 + $0x10] sm:$0xf]
        %v345 = vld [vmem:[%s1 + $0x14] sm:$0xf]
        %v346 = vld [vmem:[%s1 + $0x18] sm:$0xf]
        %v347 = vld [vmem:[%s1 + $0x1c] sm:$0xf]
        %v348 = vld [vmem:[%s1 + $0x20] sm:$0xf]
        %v349 = vld [vmem:[%s1 + $0x24] sm:$0xf]
        %v350 = vld [vmem:[%s1 + $0x28] sm:$0xf]
        %v351 = vld [vmem:[%s1 + $0x2c] sm:$0xf]
        %v352 = vld [vmem:[%s1 + $0x30] sm:$0xf]
        %v353 = vld [vmem:[%s1 + $0x34] sm:$0xf]
        %v354 = vld [vmem:[%s1 + $0x38] sm:$0xf]
        %v355 = vld [vmem:[%s1 + $0x3c] sm:$0xf]
        %v356 = vld [vmem:[%s1 + $0x40] sm:$0xf]
        %v357 = vld [vmem:[%s1 + $0x44] sm:$0xf]
        %v358 = vld [vmem:[%s1 + $0x48] sm:$0xf]
        %v359 = vld [vmem:[%s1 + $0x4c] sm:$0xf]
        %v360 = vld [vmem:[%s1 + $0x50] sm:$0xf]
        %v361 = vld [vmem:[%s1 + $0x54] sm:$0xf]
        %v362 = vld [vmem:[%s1 + $0x58] sm:$0xf]
        %v363 = vld [vmem:[%s1 + $0x5c] sm:$0xf]
        %v364 = vld [vmem:[%s1 + $0x60] sm:$0xf]
        %v365 = vld [vmem:[%s1 + $0x64] sm:$0xf]
        %v366 = vld [vmem:[%s1 + $0x68] sm:$0xf]
        %v367 = vld [vmem:[%s1 + $0x6c] sm:$0xf]
        %v368 = vld [vmem:[%s1 + $0x70] sm:$0xf]
        %v369 = vld [vmem:[%s1 + $0x74] sm:$0xf]
        %v370 = vld [vmem:[%s1 + $0x78] sm:$0xf]
        %v371 = vld [vmem:[%s1 + $0x7c] sm:$0xf]
        %v372 = vld [vmem:[%s1 + $0x80] sm:$0xf]
        %v373 = vld [vmem:[%s1 + $0x84] sm:$0xf]
        %v374 = vld [vmem:[%s1 + $0x88] sm:$0xf]
        %v375 = vld [vmem:[%s1 + $0x8c] sm:$0xf]
        %v376 = vld [vmem:[%s1 + $0x90] sm:$0xf]
        %v377 = vld [vmem:[%s1 + $0x94] sm:$0xf]
        %v378 = vld [vmem:[%s1 + $0x98] sm:$0xf]
        %v379 = vld [vmem:[%s1 + $0x9c] sm:$0xf]
        %v380 = vld [vmem:[%s1 + $0xa0] sm:$0xf]
        %v381 = vld [vmem:[%s1 + $0xa4] sm:$0xf]
        %v382 = vld [vmem:[%s1 + $0xa8] sm:$0xf]
        %v383 = vld [vmem:[%s1 + $0xac] sm:$0xf]
        %v384 = vld [vmem:[%s1 + $0xb0] sm:$0xf]
        %v385 = vld [vmem:[%s1 + $0xb4] sm:$0xf]
        %v386 = vld [vmem:[%s1 + $0xb8] sm:$0xf]
        %v387 = vld [vmem:[%s1 + $0xbc] sm:$0xf]
        %v388 = vld [vmem:[%s1 + $0xc0] sm:$0xf]
        %v389 = vld [vmem:[%s1 + $0xc4] sm:$0xf]
        %v390 = vld [vmem:[%s1 + $0xc8] sm:$0xf]
        %v391 = vld [vmem:[%s1 + $0xcc] sm:$0xf]
        %v392 = vld [vmem:[%s1 + $0xd0] sm:$0xf]
        %v393 = vld [vmem:[%s1 + $0xd4] sm:$0xf]
        %v394 = vld [vmem:[%s1 + $0xd8] sm:$0xf]
        %v395 = vld [vmem:[%s1 + $0xdc] sm:$0xf]
        %v396 = vld [vmem:[%s1 + $0xe0] sm:$0xf]
        %v397 = vld [vmem:[%s1 + $0xe4] sm:$0xf]
        %v398 = vld [vmem:[%s1 + $0xe8] sm:$0xf]
        %v399 = vld [vmem:[%s1 + $0xec] sm:$0xf]
        %v400 = vld [vmem:[%s1 + $0xf0] sm:$0xf]
        %v401 = vld [vmem:[%s1 + $0xf4] sm:$0xf]
        %v402 = vld [vmem:[%s1 + $0xf8] sm:$0xf]
        %v403 = vld [vmem:[%s1 + $0xfc] sm:$0xf]
        %v404 = vld [vmem:[%s1 + $0x100] sm:$0xf]
        %v405 = vld [vmem:[%s1 + $0x104] sm:$0xf]
        %v406 = vld [vmem:[%s2] sm:$0x1]
        %v408 = vlaneseq
        %v409 = vshrl.u32 %v408, 7
        %v410 = vsub.s32 0, %v409
        %v411 = vrot.slane %v406, %v410
        %v479 = vunpack.c.l.b16 %v340
        %v480 = vunpack.c.l.b16 %v341
        %v481 = vunpack.c.l.b16 %v342
        %v482 = vunpack.c.l.b16 %v343
        %v483 = vunpack.c.l.b16 %v344
        %v484 = vunpack.c.l.b16 %v345
        %v485 = vunpack.c.l.b16 %v346
        %v486 = vunpack.c.l.b16 %v347
        %v487 = vunpack.c.l.b16 %v348
        %v488 = vunpack.c.l.b16 %v349
        %v489 = vunpack.c.l.b16 %v350
        %v490 = vunpack.c.l.b16 %v351
        %v491 = vunpack.c.l.b16 %v352
        %v492 = vunpack.c.l.b16 %v353
        %v493 = vunpack.c.l.b16 %v354
        %v494 = vunpack.c.l.b16 %v355
        %v495 = vunpack.c.l.b16 %v356
        %v496 = vunpack.c.l.b16 %v357
        %v497 = vunpack.c.l.b16 %v358
        %v498 = vunpack.c.l.b16 %v359
        %v499 = vunpack.c.l.b16 %v360
        %v500 = vunpack.c.l.b16 %v361
        %v501 = vunpack.c.l.b16 %v362
        %v502 = vunpack.c.l.b16 %v363
        %v503 = vunpack.c.l.b16 %v364
        %v504 = vunpack.c.l.b16 %v365
        %v505 = vunpack.c.l.b16 %v366
        %v506 = vunpack.c.l.b16 %v367
        %v507 = vunpack.c.l.b16 %v368
        %v508 = vunpack.c.l.b16 %v369
        %v509 = vunpack.c.l.b16 %v370
        %v510 = vunpack.c.l.b16 %v371
        %v511 = vunpack.c.l.b16 %v372
        %v512 = vunpack.c.l.b16 %v373
        %v513 = vunpack.c.l.b16 %v374
        %v514 = vunpack.c.l.b16 %v375
        %v515 = vunpack.c.l.b16 %v376
        %v516 = vunpack.c.l.b16 %v377
        %v517 = vunpack.c.l.b16 %v378
        %v518 = vunpack.c.l.b16 %v379
        %v519 = vunpack.c.l.b16 %v380
        %v520 = vunpack.c.l.b16 %v381
        %v521 = vunpack.c.l.b16 %v382
        %v522 = vunpack.c.l.b16 %v383
        %v523 = vunpack.c.l.b16 %v384
        %v524 = vunpack.c.l.b16 %v385
        %v525 = vunpack.c.l.b16 %v386
        %v526 = vunpack.c.l.b16 %v387
        %v527 = vunpack.c.l.b16 %v388
        %v528 = vunpack.c.l.b16 %v389
        %v529 = vunpack.c.l.b16 %v390
        %v530 = vunpack.c.l.b16 %v391
        %v531 = vunpack.c.l.b16 %v392
        %v532 = vunpack.c.l.b16 %v393
        %v533 = vunpack.c.l.b16 %v394
        %v534 = vunpack.c.l.b16 %v395
        %v535 = vunpack.c.l.b16 %v396
        %v536 = vunpack.c.l.b16 %v397
        %v537 = vunpack.c.l.b16 %v398
        %v538 = vunpack.c.l.b16 %v399
        %v539 = vunpack.c.l.b16 %v400
        %v540 = vunpack.c.l.b16 %v401
        %v541 = vunpack.c.l.b16 %v402
        %v542 = vunpack.c.l.b16 %v403
        %v543 = vunpack.c.l.b16 %v404
        %v544 = vunpack.c.l.b16 %v405
        %v545 = vpack.c.b16 %v480, %v479
        %v546 = vpack.c.b16 %v482, %v481
        %v547 = vpack.c.b16 %v484, %v483
        %v548 = vpack.c.b16 %v486, %v485
        %v549 = vpack.c.b16 %v488, %v487
        %v550 = vpack.c.b16 %v490, %v489
        %v551 = vpack.c.b16 %v492, %v491
        %v552 = vpack.c.b16 %v494, %v493
        %v553 = vpack.c.b16 %v496, %v495
        %v554 = vpack.c.b16 %v498, %v497
        %v555 = vpack.c.b16 %v500, %v499
        %v556 = vpack.c.b16 %v502, %v501
        %v557 = vpack.c.b16 %v504, %v503
        %v558 = vpack.c.b16 %v506, %v505
        %v559 = vpack.c.b16 %v508, %v507
        %v560 = vpack.c.b16 %v510, %v509
        %v561 = vpack.c.b16 %v512, %v511
        %v562 = vpack.c.b16 %v514, %v513
        %v563 = vpack.c.b16 %v516, %v515
        %v564 = vpack.c.b16 %v518, %v517
        %v565 = vpack.c.b16 %v520, %v519
        %v566 = vpack.c.b16 %v522, %v521
        %v567 = vpack.c.b16 %v524, %v523
        %v568 = vpack.c.b16 %v526, %v525
        %v569 = vpack.c.b16 %v528, %v527
        %v570 = vpack.c.b16 %v530, %v529
        %v571 = vpack.c.b16 %v532, %v531
        %v572 = vpack.c.b16 %v534, %v533
        %v573 = vpack.c.b16 %v536, %v535
        %v574 = vpack.c.b16 %v538, %v537
        %v575 = vpack.c.b16 %v540, %v539
        %v576 = vpack.c.b16 %v542, %v541
        %v577 = vpack.c.b16 %v544, %v543
        %vm610 = vcmask 121856
        %v612 = vsel %vm610, %v294, 0
        %v615 = vsel %vm610, %v299, 0
        %v618 = vsel %vm610, %v304, 0
        %v621 = vsel %vm610, %v309, 0
        %v624 = vsel %vm610, %v314, 0
        %v627 = vsel %vm610, %v319, 0
        %v630 = vsel %vm610, %v324, 0
        %v633 = vsel %vm610, %v329, 0
        %v636 = vsel %vm610, %v334, 0
        %v639 = vsel %vm610, %v339, 0
        %vm641 = vcmask 1046528
        %vm642 = vcmask 1047552
        %v643 = vsel %vm641, 4294967295, 65535
        %v644 = vsel %vm642, %v643, 0
        %v646 = vand.u32 %v577, %v644
        %648 = vmatprep.subr.bf16.mxu0 0
        %649 = vmatpush1.bf16.msra.mxu0 %v552
        %650 = vmatprep.subr.bf16.mxu0 0
        %651 = vmatpush1.bf16.msra.mxu0 %v551
        %652 = vmatprep.subr.bf16.mxu0 0
        %653 = vmatpush1.bf16.msra.mxu0 %v550
        %654 = vmatprep.subr.bf16.mxu0 0
        %655 = vmatpush1.bf16.msra.mxu0 %v549
        %656 = vmatprep.subr.bf16.mxu0 0
        %657 = vmatpush1.bf16.msra.mxu0 %v548
        %658 = vmatprep.subr.bf16.mxu0 0
        %659 = vmatpush1.bf16.msra.mxu0 %v547
        %660 = vmatprep.subr.bf16.mxu0 0
        %661 = vmatpush1.bf16.msra.mxu0 %v546
        %662 = vmatprep.subr.bf16.mxu0 0
        %663 = vmatpush1.bf16.msra.mxu0 %v545
        %664 = vmatprep.subr.bf16.mxu0 0
        %665 = vmatpush2.bf16.msra.mxu0 %v560
        %666 = vmatprep.subr.bf16.mxu0 0
        %667 = vmatpush2.bf16.msra.mxu0 %v559
        %668 = vmatprep.subr.bf16.mxu0 0
        %669 = vmatpush2.bf16.msra.mxu0 %v558
        %670 = vmatprep.subr.bf16.mxu0 0
        %671 = vmatpush2.bf16.msra.mxu0 %v557
        %672 = vmatprep.subr.bf16.mxu0 0
        %673 = vmatpush2.bf16.msra.mxu0 %v556
        %674 = vmatprep.subr.bf16.mxu0 0
        %675 = vmatpush2.bf16.msra.mxu0 %v555
        %676 = vmatprep.subr.bf16.mxu0 0
        %677 = vmatpush2.bf16.msra.mxu0 %v554
        %678 = vmatprep.subr.bf16.mxu0 0
        %679 = vmatpush2.bf16.msra.mxu0 %v553
        %680 = vmatprep.mubr.bf16.mxu0 %v291
        %681 = vmatmul.mubr.bf16.gmra.mxu0 %v290
        %v682 = vpop.f32.mrf.mxu0
        %v683 = vadd.f32 %v411, %v682
        %v684 = vpop.f32.mrf.mxu0
        %v685 = vpop.f32.mrf.mxu0
        %v686 = vadd.f32 %v411, %v685
        %v687 = vpop.f32.mrf.mxu0
        %688 = vmatprep.mubr.bf16.mxu0 %v296
        %689 = vmatmul.mubr.bf16.gmra.mxu0 %v295
        %v690 = vpop.f32.mrf.mxu0
        %v691 = vadd.f32 %v411, %v690
        %v692 = vpop.f32.mrf.mxu0
        %v693 = vpop.f32.mrf.mxu0
        %v694 = vadd.f32 %v411, %v693
        %v695 = vpop.f32.mrf.mxu0
        %696 = vmatprep.mubr.bf16.mxu0 %v301
        %697 = vmatmul.mubr.bf16.gmra.mxu0 %v300
        %v698 = vpop.f32.mrf.mxu0
        %v699 = vadd.f32 %v411, %v698
        %v700 = vpop.f32.mrf.mxu0
        %v701 = vpop.f32.mrf.mxu0
        %v702 = vadd.f32 %v411, %v701
        %v703 = vpop.f32.mrf.mxu0
        %704 = vmatprep.mubr.bf16.mxu0 %v306
        %705 = vmatmul.mubr.bf16.gmra.mxu0 %v305
        %v706 = vpop.f32.mrf.mxu0
        %v707 = vadd.f32 %v411, %v706
        %v708 = vpop.f32.mrf.mxu0
        %v709 = vpop.f32.mrf.mxu0
        %v710 = vadd.f32 %v411, %v709
        %v711 = vpop.f32.mrf.mxu0
        %712 = vmatprep.mubr.bf16.mxu0 %v311
        %713 = vmatmul.mubr.bf16.gmra.mxu0 %v310
        %v714 = vpop.f32.mrf.mxu0
        %v715 = vadd.f32 %v411, %v714
        %v716 = vpop.f32.mrf.mxu0
        %v717 = vpop.f32.mrf.mxu0
        %v718 = vadd.f32 %v411, %v717
        %v719 = vpop.f32.mrf.mxu0
        %720 = vmatprep.mubr.bf16.mxu0 %v316
        %721 = vmatmul.mubr.bf16.gmra.mxu0 %v315
        %v722 = vpop.f32.mrf.mxu0
        %v723 = vadd.f32 %v411, %v722
        %v724 = vpop.f32.mrf.mxu0
        %v725 = vpop.f32.mrf.mxu0
        %v726 = vadd.f32 %v411, %v725
        %v727 = vpop.f32.mrf.mxu0
        %728 = vmatprep.mubr.bf16.mxu0 %v321
        %729 = vmatmul.mubr.bf16.gmra.mxu0 %v320
        %v730 = vpop.f32.mrf.mxu0
        %v731 = vadd.f32 %v411, %v730
        %v732 = vpop.f32.mrf.mxu0
        %v733 = vpop.f32.mrf.mxu0
        %v734 = vadd.f32 %v411, %v733
        %v735 = vpop.f32.mrf.mxu0
        %736 = vmatprep.mubr.bf16.mxu0 %v326
        %737 = vmatmul.mubr.bf16.gmra.mxu0 %v325
        %v738 = vpop.f32.mrf.mxu0
        %v739 = vadd.f32 %v411, %v738
        %v740 = vpop.f32.mrf.mxu0
        %v741 = vpop.f32.mrf.mxu0
        %v742 = vadd.f32 %v411, %v741
        %v743 = vpop.f32.mrf.mxu0
        %744 = vmatprep.mubr.bf16.mxu0 %v331
        %745 = vmatmul.mubr.bf16.gmra.mxu0 %v330
        %v746 = vpop.f32.mrf.mxu0
        %v747 = vadd.f32 %v411, %v746
        %v748 = vpop.f32.mrf.mxu0
        %v749 = vpop.f32.mrf.mxu0
        %v750 = vadd.f32 %v411, %v749
        %v751 = vpop.f32.mrf.mxu0
        %752 = vmatprep.mubr.bf16.mxu0 %v336
        %753 = vmatmul.mubr.bf16.gmra.mxu0 %v335
        %v754 = vpop.f32.mrf.mxu0
        %v755 = vadd.f32 %v411, %v754
        %v756 = vpop.f32.mrf.mxu0
        %v757 = vpop.f32.mrf.mxu0
        %v758 = vpop.f32.mrf.mxu0
        %759 = vdwg.mxu0
        %760 = vmatprep.subr.bf16.mxu0 0
        %761 = vmatpush1.bf16.msra.mxu0 %v568
        %762 = vmatprep.subr.bf16.mxu0 0
        %763 = vmatpush1.bf16.msra.mxu0 %v567
        %764 = vmatprep.subr.bf16.mxu0 0
        %765 = vmatpush1.bf16.msra.mxu0 %v566
        %766 = vmatprep.subr.bf16.mxu0 0
        %767 = vmatpush1.bf16.msra.mxu0 %v565
        %768 = vmatprep.subr.bf16.mxu0 0
        %769 = vmatpush1.bf16.msra.mxu0 %v564
        %770 = vmatprep.subr.bf16.mxu0 0
        %771 = vmatpush1.bf16.msra.mxu0 %v563
        %772 = vmatprep.subr.bf16.mxu0 0
        %773 = vmatpush1.bf16.msra.mxu0 %v562
        %774 = vmatprep.subr.bf16.mxu0 0
        %775 = vmatpush1.bf16.msra.mxu0 %v561
        %776 = vmatprep.subr.bf16.mxu0 0
        %777 = vmatpush2.bf16.msra.mxu0 %v576
        %778 = vmatprep.subr.bf16.mxu0 0
        %779 = vmatpush2.bf16.msra.mxu0 %v575
        %780 = vmatprep.subr.bf16.mxu0 0
        %781 = vmatpush2.bf16.msra.mxu0 %v574
        %782 = vmatprep.subr.bf16.mxu0 0
        %783 = vmatpush2.bf16.msra.mxu0 %v573
        %784 = vmatprep.subr.bf16.mxu0 0
        %785 = vmatpush2.bf16.msra.mxu0 %v572
        %786 = vmatprep.subr.bf16.mxu0 0
        %787 = vmatpush2.bf16.msra.mxu0 %v571
        %788 = vmatprep.subr.bf16.mxu0 0
        %789 = vmatpush2.bf16.msra.mxu0 %v570
        %790 = vmatprep.subr.bf16.mxu0 0
        %791 = vmatpush2.bf16.msra.mxu0 %v569
        %792 = vmatprep.mubr.bf16.mxu0 %v293
        %793 = vmatmul.mubr.bf16.gmra.mxu0 %v292
        %v794 = vpop.f32.mrf.mxu0
        %v795 = vadd.f32 %v683, %v794
        %v796 = vpop.f32.mrf.mxu0
        %v797 = vpop.f32.mrf.mxu0
        %v798 = vadd.f32 %v686, %v797
        %v799 = vpop.f32.mrf.mxu0
        %800 = vmatprep.mubr.bf16.mxu0 %v298
        %801 = vmatmul.mubr.bf16.gmra.mxu0 %v297
        %v802 = vpop.f32.mrf.mxu0
        %v803 = vadd.f32 %v691, %v802
        %v804 = vpop.f32.mrf.mxu0
        %v805 = vpop.f32.mrf.mxu0
        %v806 = vadd.f32 %v694, %v805
        %v807 = vpop.f32.mrf.mxu0
        %808 = vmatprep.mubr.bf16.mxu0 %v303
        %809 = vmatmul.mubr.bf16.gmra.mxu0 %v302
        %v810 = vpop.f32.mrf.mxu0
        %v811 = vadd.f32 %v699, %v810
        %v812 = vpop.f32.mrf.mxu0
        %v813 = vpop.f32.mrf.mxu0
        %v814 = vadd.f32 %v702, %v813
        %v815 = vpop.f32.mrf.mxu0
        %816 = vmatprep.mubr.bf16.mxu0 %v308
        %817 = vmatmul.mubr.bf16.gmra.mxu0 %v307
        %v818 = vpop.f32.mrf.mxu0
        %v819 = vadd.f32 %v707, %v818
        %v820 = vpop.f32.mrf.mxu0
        %v821 = vpop.f32.mrf.mxu0
        %v822 = vadd.f32 %v710, %v821
        %v823 = vpop.f32.mrf.mxu0
        %824 = vmatprep.mubr.bf16.mxu0 %v313
        %825 = vmatmul.mubr.bf16.gmra.mxu0 %v312
        %v826 = vpop.f32.mrf.mxu0
        %v827 = vadd.f32 %v715, %v826
        %v828 = vpop.f32.mrf.mxu0
        %v829 = vpop.f32.mrf.mxu0
        %v830 = vadd.f32 %v718, %v829
        %v831 = vpop.f32.mrf.mxu0
        %832 = vmatprep.mubr.bf16.mxu0 %v318
        %833 = vmatmul.mubr.bf16.gmra.mxu0 %v317
        %v834 = vpop.f32.mrf.mxu0
        %v835 = vadd.f32 %v723, %v834
        %v836 = vpop.f32.mrf.mxu0
        %v837 = vpop.f32.mrf.mxu0
        %v838 = vadd.f32 %v726, %v837
        %v839 = vpop.f32.mrf.mxu0
        %840 = vmatprep.mubr.bf16.mxu0 %v323
        %841 = vmatmul.mubr.bf16.gmra.mxu0 %v322
        %v842 = vpop.f32.mrf.mxu0
        %v843 = vadd.f32 %v731, %v842
        %v844 = vpop.f32.mrf.mxu0
        %v845 = vpop.f32.mrf.mxu0
        %v846 = vadd.f32 %v734, %v845
        %v847 = vpop.f32.mrf.mxu0
        %848 = vmatprep.mubr.bf16.mxu0 %v328
        %849 = vmatmul.mubr.bf16.gmra.mxu0 %v327
        %v850 = vpop.f32.mrf.mxu0
        %v851 = vadd.f32 %v739, %v850
        %v852 = vpop.f32.mrf.mxu0
        %v853 = vpop.f32.mrf.mxu0
        %v854 = vadd.f32 %v742, %v853
        %v855 = vpop.f32.mrf.mxu0
        %856 = vmatprep.mubr.bf16.mxu0 %v333
        %857 = vmatmul.mubr.bf16.gmra.mxu0 %v332
        %v858 = vpop.f32.mrf.mxu0
        %v859 = vadd.f32 %v747, %v858
        %v860 = vpop.f32.mrf.mxu0
        %v861 = vpop.f32.mrf.mxu0
        %v862 = vadd.f32 %v750, %v861
        %v863 = vpop.f32.mrf.mxu0
        %864 = vmatprep.mubr.bf16.mxu0 %v338
        %865 = vmatmul.mubr.bf16.gmra.mxu0 %v337
        %v866 = vpop.f32.mrf.mxu0
        %v867 = vadd.f32 %v755, %v866
        %v868 = vpop.f32.mrf.mxu0
        %v869 = vpop.f32.mrf.mxu0
        %v870 = vpop.f32.mrf.mxu0
        %871 = vdwg.mxu0
        %872 = vmatprep.subr.bf16.mxu0 0
        %873 = vmatpush1.bf16.msra.mxu0 0
        %874 = vmatprep.subr.bf16.mxu0 0
        %875 = vmatpush1.bf16.msra.mxu0 0
        %876 = vmatprep.subr.bf16.mxu0 0
        %877 = vmatpush1.bf16.msra.mxu0 0
        %878 = vmatprep.subr.bf16.mxu0 0
        %879 = vmatpush1.bf16.msra.mxu0 0
        %880 = vmatprep.subr.bf16.mxu0 0
        %881 = vmatpush1.bf16.msra.mxu0 0
        %882 = vmatprep.subr.bf16.mxu0 0
        %883 = vmatpush1.bf16.msra.mxu0 0
        %884 = vmatprep.subr.bf16.mxu0 0
        %885 = vmatpush1.bf16.msra.mxu0 0
        %886 = vmatprep.subr.bf16.mxu0 0
        %887 = vmatpush1.bf16.msra.mxu0 %v646
        %888 = vmatprep.subr.bf16.mxu0 0
        %889 = vmatpush2.bf16.msra.mxu0 0
        %890 = vmatprep.subr.bf16.mxu0 0
        %891 = vmatpush2.bf16.msra.mxu0 0
        %892 = vmatprep.subr.bf16.mxu0 0
        %893 = vmatpush2.bf16.msra.mxu0 0
        %894 = vmatprep.subr.bf16.mxu0 0
        %895 = vmatpush2.bf16.msra.mxu0 0
        %896 = vmatprep.subr.bf16.mxu0 0
        %897 = vmatpush2.bf16.msra.mxu0 0
        %898 = vmatprep.subr.bf16.mxu0 0
        %899 = vmatpush2.bf16.msra.mxu0 0
        %900 = vmatprep.subr.bf16.mxu0 0
        %901 = vmatpush2.bf16.msra.mxu0 0
        %902 = vmatprep.subr.bf16.mxu0 0
        %903 = vmatpush2.bf16.msra.mxu0 0
        %904 = vmatprep.mubr.bf16.mxu0 0
        %905 = vmatmul.mubr.bf16.gmra.mxu0 %v612
        %v906 = vpop.f32.mrf.mxu0
        %v907 = vadd.f32 %v795, %v906
        %v908 = vpop.f32.mrf.mxu0
        %v909 = vpop.f32.mrf.mxu0
        %v910 = vadd.f32 %v798, %v909
        %v911 = vpop.f32.mrf.mxu0
        %912 = vmatprep.mubr.bf16.mxu0 0
        %913 = vmatmul.mubr.bf16.gmra.mxu0 %v615
        %v914 = vpop.f32.mrf.mxu0
        %v915 = vadd.f32 %v803, %v914
        %v916 = vpop.f32.mrf.mxu0
        %v917 = vpop.f32.mrf.mxu0
        %v918 = vadd.f32 %v806, %v917
        %v919 = vpop.f32.mrf.mxu0
        %920 = vmatprep.mubr.bf16.mxu0 0
        %921 = vmatmul.mubr.bf16.gmra.mxu0 %v618
        %v922 = vpop.f32.mrf.mxu0
        %v923 = vadd.f32 %v811, %v922
        %v924 = vpop.f32.mrf.mxu0
        %v925 = vpop.f32.mrf.mxu0
        %v926 = vadd.f32 %v814, %v925
        %v927 = vpop.f32.mrf.mxu0
        %928 = vmatprep.mubr.bf16.mxu0 0
        %929 = vmatmul.mubr.bf16.gmra.mxu0 %v621
        %v930 = vpop.f32.mrf.mxu0
        %v931 = vadd.f32 %v819, %v930
        %v932 = vpop.f32.mrf.mxu0
        %v933 = vpop.f32.mrf.mxu0
        %v934 = vadd.f32 %v822, %v933
        %v935 = vpop.f32.mrf.mxu0
        %936 = vmatprep.mubr.bf16.mxu0 0
        %937 = vmatmul.mubr.bf16.gmra.mxu0 %v624
        %v938 = vpop.f32.mrf.mxu0
        %v939 = vadd.f32 %v827, %v938
        %v940 = vpop.f32.mrf.mxu0
        %v941 = vpop.f32.mrf.mxu0
        %v942 = vadd.f32 %v830, %v941
        %v943 = vpop.f32.mrf.mxu0
        %944 = vmatprep.mubr.bf16.mxu0 0
        %945 = vmatmul.mubr.bf16.gmra.mxu0 %v627
        %v946 = vpop.f32.mrf.mxu0
        %v947 = vadd.f32 %v835, %v946
        %v948 = vpop.f32.mrf.mxu0
        %v949 = vpop.f32.mrf.mxu0
        %v950 = vadd.f32 %v838, %v949
        %v951 = vpop.f32.mrf.mxu0
        %952 = vmatprep.mubr.bf16.mxu0 0
        %953 = vmatmul.mubr.bf16.gmra.mxu0 %v630
        %v954 = vpop.f32.mrf.mxu0
        %v955 = vadd.f32 %v843, %v954
        %v956 = vpop.f32.mrf.mxu0
        %v957 = vpop.f32.mrf.mxu0
        %v958 = vadd.f32 %v846, %v957
        %v959 = vpop.f32.mrf.mxu0
        %960 = vmatprep.mubr.bf16.mxu0 0
        %961 = vmatmul.mubr.bf16.gmra.mxu0 %v633
        %v962 = vpop.f32.mrf.mxu0
        %v963 = vadd.f32 %v851, %v962
        %v964 = vpop.f32.mrf.mxu0
        %v965 = vpop.f32.mrf.mxu0
        %v966 = vadd.f32 %v854, %v965
        %v967 = vpop.f32.mrf.mxu0
        %968 = vmatprep.mubr.bf16.mxu0 0
        %969 = vmatmul.mubr.bf16.gmra.mxu0 %v636
        %v970 = vpop.f32.mrf.mxu0
        %v971 = vadd.f32 %v859, %v970
        %v972 = vpop.f32.mrf.mxu0
        %v973 = vpop.f32.mrf.mxu0
        %v974 = vadd.f32 %v862, %v973
        %v975 = vpop.f32.mrf.mxu0
        %976 = vmatprep.mubr.bf16.mxu0 0
        %977 = vmatmul.mubr.bf16.gmra.mxu0 %v639
        %v978 = vpop.f32.mrf.mxu0
        %v979 = vadd.f32 %v867, %v978
        %v980 = vpop.f32.mrf.mxu0
        %v981 = vpop.f32.mrf.mxu0
        %v982 = vpop.f32.mrf.mxu0
        %983 = vdwg.mxu0
        %v984 = vsub.f32 0.0, %v907
        %v985 = vsub.f32 0.0, %v910
        %v986 = vsub.f32 0.0, %v915
        %v987 = vsub.f32 0.0, %v918
        %v988 = vsub.f32 0.0, %v923
        %v989 = vsub.f32 0.0, %v926
        %v990 = vsub.f32 0.0, %v931
        %v991 = vsub.f32 0.0, %v934
        %v992 = vsub.f32 0.0, %v939
        %v993 = vsub.f32 0.0, %v942
        %v994 = vsub.f32 0.0, %v947
        %v995 = vsub.f32 0.0, %v950
        %v996 = vsub.f32 0.0, %v955
        %v997 = vsub.f32 0.0, %v958
        %v998 = vsub.f32 0.0, %v963
        %v999 = vsub.f32 0.0, %v966
        %v1000 = vsub.f32 0.0, %v971
        %v1001 = vsub.f32 0.0, %v974
        %v1002 = vsub.f32 0.0, %v979
        %v1003 = vmul.f32 %v984, 1.442695
        %v1004 = vpow.pop %v1003
        %v1005 = vmul.f32 %v985, 1.442695
        %v1006 = vpow.pop %v1005
        %v1007 = vmul.f32 %v986, 1.442695
        %v1008 = vpow.pop %v1007
        %v1009 = vmul.f32 %v987, 1.442695
        %v1010 = vpow.pop %v1009
        %v1011 = vmul.f32 %v988, 1.442695
        %v1012 = vpow.pop %v1011
        %v1013 = vmul.f32 %v989, 1.442695
        %v1014 = vpow.pop %v1013
        %v1015 = vmul.f32 %v990, 1.442695
        %v1016 = vpow.pop %v1015
        %v1017 = vmul.f32 %v991, 1.442695
        %v1018 = vpow.pop %v1017
        %v1019 = vmul.f32 %v992, 1.442695
        %v1020 = vpow.pop %v1019
        %v1021 = vmul.f32 %v993, 1.442695
        %v1022 = vpow.pop %v1021
        %v1023 = vmul.f32 %v994, 1.442695
        %v1024 = vpow.pop %v1023
        %v1025 = vmul.f32 %v995, 1.442695
        %v1026 = vpow.pop %v1025
        %v1027 = vmul.f32 %v996, 1.442695
        %v1028 = vpow.pop %v1027
        %v1029 = vmul.f32 %v997, 1.442695
        %v1030 = vpow.pop %v1029
        %v1031 = vmul.f32 %v998, 1.442695
        %v1032 = vpow.pop %v1031
        %v1033 = vmul.f32 %v999, 1.442695
        %v1034 = vpow.pop %v1033
        %v1035 = vmul.f32 %v1000, 1.442695
        %v1036 = vpow.pop %v1035
        %v1037 = vmul.f32 %v1001, 1.442695
        %v1038 = vpow.pop %v1037
        %v1039 = vmul.f32 %v1002, 1.442695
        %v1040 = vpow.pop %v1039
        %v1041 = vadd.f32 %v1004, 1.0
        %v1042 = vadd.f32 %v1006, 1.0
        %v1043 = vadd.f32 %v1008, 1.0
        %v1044 = vadd.f32 %v1010, 1.0
        %v1045 = vadd.f32 %v1012, 1.0
        %v1046 = vadd.f32 %v1014, 1.0
        %v1047 = vadd.f32 %v1016, 1.0
        %v1048 = vadd.f32 %v1018, 1.0
        %v1049 = vadd.f32 %v1020, 1.0
        %v1050 = vadd.f32 %v1022, 1.0
        %v1051 = vadd.f32 %v1024, 1.0
        %v1052 = vadd.f32 %v1026, 1.0
        %v1053 = vadd.f32 %v1028, 1.0
        %v1054 = vadd.f32 %v1030, 1.0
        %v1055 = vadd.f32 %v1032, 1.0
        %v1056 = vadd.f32 %v1034, 1.0
        %v1057 = vadd.f32 %v1036, 1.0
        %v1058 = vadd.f32 %v1038, 1.0
        %v1059 = vadd.f32 %v1040, 1.0
        %v1060 = vrcp.pop %v1041
        %v1061 = vmul.f32 1.0, %v1060
        %v1062 = vrcp.pop %v1042
        %v1063 = vmul.f32 1.0, %v1062
        %v1064 = vrcp.pop %v1043
        %v1065 = vmul.f32 1.0, %v1064
        %v1066 = vrcp.pop %v1044
        %v1067 = vmul.f32 1.0, %v1066
        %v1068 = vrcp.pop %v1045
        %v1069 = vmul.f32 1.0, %v1068
        %v1070 = vrcp.pop %v1046
        %v1071 = vmul.f32 1.0, %v1070
        %v1072 = vrcp.pop %v1047
        %v1073 = vmul.f32 1.0, %v1072
        %v1074 = vrcp.pop %v1048
        %v1075 = vmul.f32 1.0, %v1074
        %v1076 = vrcp.pop %v1049
        %v1077 = vmul.f32 1.0, %v1076
        %v1078 = vrcp.pop %v1050
        %v1079 = vmul.f32 1.0, %v1078
        %v1080 = vrcp.pop %v1051
        %v1081 = vmul.f32 1.0, %v1080
        %v1082 = vrcp.pop %v1052
        %v1083 = vmul.f32 1.0, %v1082
        %v1084 = vrcp.pop %v1053
        %v1085 = vmul.f32 1.0, %v1084
        %v1086 = vrcp.pop %v1054
        %v1087 = vmul.f32 1.0, %v1086
        %v1088 = vrcp.pop %v1055
        %v1089 = vmul.f32 1.0, %v1088
        %v1090 = vrcp.pop %v1056
        %v1091 = vmul.f32 1.0, %v1090
        %v1092 = vrcp.pop %v1057
        %v1093 = vmul.f32 1.0, %v1092
        %v1094 = vrcp.pop %v1058
        %v1095 = vmul.f32 1.0, %v1094
        %v1096 = vrcp.pop %v1059
        %v1097 = vmul.f32 1.0, %v1096
        %vm1098 = vcmask 39936
        %1099 = vst.msk [vmem:[%s192] sm:$0xff] %vm1098, %v1061
        %1100 = vst.msk [vmem:[%s192 + $0x8] sm:$0xff] %vm1098, %v1063
        %1101 = vst.msk [vmem:[%s192 + $0x10] sm:$0xff] %vm1098, %v1065
        %1102 = vst.msk [vmem:[%s192 + $0x18] sm:$0xff] %vm1098, %v1067
        %1103 = vst.msk [vmem:[%s192 + $0x20] sm:$0xff] %vm1098, %v1069
        %1104 = vst.msk [vmem:[%s192 + $0x28] sm:$0xff] %vm1098, %v1071
        %1105 = vst.msk [vmem:[%s192 + $0x30] sm:$0xff] %vm1098, %v1073
        %1106 = vst.msk [vmem:[%s192 + $0x38] sm:$0xff] %vm1098, %v1075
        %1107 = vst.msk [vmem:[%s192 + $0x40] sm:$0xff] %vm1098, %v1077
        %1108 = vst.msk [vmem:[%s192 + $0x48] sm:$0xff] %vm1098, %v1079
        %1109 = vst.msk [vmem:[%s192 + $0x50] sm:$0xff] %vm1098, %v1081
        %1110 = vst.msk [vmem:[%s192 + $0x58] sm:$0xff] %vm1098, %v1083
        %1111 = vst.msk [vmem:[%s192 + $0x60] sm:$0xff] %vm1098, %v1085
        %1112 = vst.msk [vmem:[%s192 + $0x68] sm:$0xff] %vm1098, %v1087
        %1113 = vst.msk [vmem:[%s192 + $0x70] sm:$0xff] %vm1098, %v1089
        %1114 = vst.msk [vmem:[%s192 + $0x78] sm:$0xff] %vm1098, %v1091
        %1115 = vst.msk [vmem:[%s192 + $0x80] sm:$0xff] %vm1098, %v1093
        %1116 = vst.msk [vmem:[%s192 + $0x88] sm:$0xff] %vm1098, %v1095
        %1117 = vst.msk [vmem:[%s192 + $0x90] sm:$0xff] %vm1098, %v1097
        %s1118 = smul.u32 19, %s17
        %p1119 = scmp.lt.s32.totalorder %s1118, 37
        %s1120 = scalar_select %p1119, %s1118, 37
        %s1121 = smul.addr %s1120, 8
        %s1122 = scalar_lea.vmem %s3, %s1121
        // Predicated region
        $region37: #{tpu_custom_call.1} parent=31 // pred_check
          %p1123 = pneg %p103
        $region38: #{tpu_custom_call.1} parent=31 // pred_check_branch
          %1125 = sbr.rel (%p1123) target = $region40
        $region39: #{tpu_custom_call.1} parent=31 // pred_region
          %s1126 = smul.u32 19, %s17
        $region40: #{tpu_custom_call.1} parent=31 // pred_fallthru
          _
      $region32: #{tpu_custom_call.1} parent=5 // pred_fallthru
        _
      %p1127 = scmp.le.s32.totalorder 2, %s12
      // Predicated region
      $region41: #{tpu_custom_call.1} parent=5 // pred_check
        %p1128 = pneg %p1127
      $region42: #{tpu_custom_call.1} parent=5 // pred_check_branch
        %1130 = sbr.rel (%p1128) target = $region44
      $region43: #{tpu_custom_call.1} parent=5 // pred_region
        %s1131 = ssub.s32 %s12, 2
        // Predicated region
        $region45: #{tpu_custom_call.1} parent=43 // pred_check
          %p1132 = pneg %p109
        $region46: #{tpu_custom_call.1} parent=43 // pred_check_branch
          %1134 = sbr.rel (%p1132) target = $region48
        $region47: #{tpu_custom_call.1} parent=43 // pred_region
          %s1135 = smul.u32 19, %s18
          %p1136 = scmp.lt.s32.totalorder %s1135, 37
          %s1137 = scalar_select %p1136, %s1135, 37
          %s1138 = smul.addr %s1137, 8
          %s1139 = scalar_lea.vmem %s3, %s1138
        $region48: #{tpu_custom_call.1} parent=43 // pred_fallthru
          _
      $region44: #{tpu_custom_call.1} parent=5 // pred_fallthru
        _
    $region6: #{tpu_custom_call.1} parent=1 // loop_footer
      %s16 = sadd.s32 1, %s12
    $region7: #{tpu_custom_call.1} parent=1 // loop_footer_branch
      %11 = sbr.rel target = $region3
    $region8: #{tpu_custom_call.1} parent=1 // loop_exit
      _
    %1140 = vsyncpa [#allocation3], 1
    %s1141 = scalar_lea.sflag [#allocation3], 1
    %1142 = vsyncpa %s1141, 1

</llo_original>
